<compile_context>
chip_gen: v7x
topology: tpu7x:2x2x1
jax: 0.10.0
libtpu: 0.0.40
codegen_flags: <defaults>
</compile_context>

<pallas_src>
import functools

import jax
import jax.numpy as jnp
from jax.experimental import pallas as pl
from jax.experimental.pallas import tpu as pltpu


def _stacked_lstm_kernel(x_ref, h0_ref, c0_ref, wih_ref, whh_ref,
                         hs_ref, cs_ref, inp_ref, *, hidden_size):
    """One grid step == one LSTM layer.

    x_ref  : (B, Kmax)            resident across all steps (zero-padded x)
    h0_ref : (1, B, H)            this layer's h_0
    c0_ref : (1, B, H)            this layer's c_0
    wih_ref: (1, Kmax, 4H)        this layer's W_ih^T (rows beyond the layer's
                                  real input width are zero)
    whh_ref: (1, H, 4H)           this layer's W_hh^T
    hs_ref : (1, B, H)            output h for this layer
    cs_ref : (1, B, H)            output c for this layer
    inp_ref: (B, Kmax) f32 VMEM   persistent inter-layer activation carry

    Gate column order inside the packed weights is [i, f, o, g] so the three
    sigmoid gates are contiguous.
    """
    H = hidden_size
    layer = pl.program_id(0)

    # Seed the activation carry with the (padded) external input at layer 0.
    @pl.when(layer == 0)
    def _():
        inp_ref[...] = x_ref[...].astype(inp_ref.dtype)

    h = h0_ref[0].astype(jnp.float32)
    c = c0_ref[0].astype(jnp.float32)
    w_ih = wih_ref[0]
    w_hh = whh_ref[0]

    # Two accumulating MXU passes (no lane-axis concat), f32 accumulation.
    # Note: with bf16 weights the LHS is downcast to bf16 here; keep the carry
    # f32 in VMEM so depth-wise error only enters through the dot itself.
    inp = inp_ref[...]
    gates = jnp.dot(inp.astype(w_ih.dtype), w_ih,
                    preferred_element_type=jnp.float32)
    gates = gates + jnp.dot(h.astype(w_hh.dtype), w_hh,
                            preferred_element_type=jnp.float32)

    # One sigmoid over the three contiguous sigmoid gates, one tanh for g.
    sig = jax.nn.sigmoid(gates[:, : 3 * H])
    i_g = sig[:, 0 * H:1 * H]
    f_g = sig[:, 1 * H:2 * H]
    o_g = sig[:, 2 * H:3 * H]
    g_g = jnp.tanh(gates[:, 3 * H:4 * H])

    c_new = f_g * c + i_g * g_g
    h_new = o_g * jnp.tanh(c_new)

    hs_ref[0] = h_new.astype(hs_ref.dtype)
    cs_ref[0] = c_new.astype(cs_ref.dtype)

    # Carry next layer's input (dropout in eval mode is identity).  Columns
    # beyond H (if Kmax > H) may hold stale data, but they only ever multiply
    # zero-padded weight rows, so the result is unaffected.
    inp_ref[:, 0:H] = h_new


def stacked_lstm_cell_forward(x, h0, c0, w_ih_all, w_hh_all):
    """StackedLSTMCell.forward (inference / eval semantics).

    x        : (B, input_size)
    h0, c0   : (L, B, H)
    w_ih_all : (L, Kmax, 4H)  per-layer W_ih^T, gate cols [i,f,o,g], zero-padded rows
    w_hh_all : (L, H,   4H)  per-layer W_hh^T, gate cols [i,f,o,g]
    Returns (out, (hs, cs)) with out == hs[-1].
    """
    B, in_sz = x.shape
    L, _, H = h0.shape
    Lw, Kmax, G4 = w_ih_all.shape
    assert Lw == L and G4 == 4 * H
    assert w_hh_all.shape == (L, H, 4 * H)
    assert Kmax >= in_sz and Kmax >= H

    # Zero-pad x on the feature axis to the shared weight-K width (outside the
    # kernel; cheap and only needed when input_size < Kmax).
    if in_sz < Kmax:
        x = jnp.pad(x, ((0, 0), (0, Kmax - in_sz)))

    out_dtype = h0.dtype
    kernel = functools.partial(_stacked_lstm_kernel, hidden_size=H)

    flops = 2 * L * B * (Kmax + H) * (4 * H)
    transcendentals = 5 * L * B * H  # 3 sigmoid + 2 tanh per element
    bytes_accessed = int(
        x.size * x.dtype.itemsize
        + h0.size * h0.dtype.itemsize
        + c0.size * c0.dtype.itemsize
        + w_ih_all.size * w_ih_all.dtype.itemsize
        + w_hh_all.size * w_hh_all.dtype.itemsize
        + 2 * L * B * H * jnp.dtype(out_dtype).itemsize)

    hs, cs = pl.pallas_call(
        kernel,
        grid=(L,),
        in_specs=[
            pl.BlockSpec((B, Kmax), lambda l: (0, 0)),             # x (resident)
            pl.BlockSpec((1, B, H), lambda l: (l, 0, 0)),          # h0, per layer
            pl.BlockSpec((1, B, H), lambda l: (l, 0, 0)),          # c0, per layer
            pl.BlockSpec((1, Kmax, 4 * H), lambda l: (l, 0, 0)),   # W_ih, per layer
            pl.BlockSpec((1, H, 4 * H), lambda l: (l, 0, 0)),      # W_hh, per layer
        ],
        out_specs=(
            pl.BlockSpec((1, B, H), lambda l: (l, 0, 0)),          # hs
            pl.BlockSpec((1, B, H), lambda l: (l, 0, 0)),          # cs
        ),
        out_shape=(
            jax.ShapeDtypeStruct((L, B, H), out_dtype),
            jax.ShapeDtypeStruct((L, B, H), out_dtype),
        ),
        scratch_shapes=[pltpu.VMEM((B, Kmax), jnp.float32)],       # inter-layer carry
        compiler_params=pltpu.CompilerParams(
            dimension_semantics=("arbitrary",),                    # layer carry is sequential
            vmem_limit_bytes=64 * 1024 * 1024,
        ),
        cost_estimate=pl.CostEstimate(
            flops=flops,
            transcendentals=transcendentals,
            bytes_accessed=bytes_accessed,
        ),
    )(x, h0, c0, w_ih_all, w_hh_all)

    out = hs[-1]
    return out, (hs, cs)


def init_params(key, num_layers, input_size, rnn_size):
    """PyTorch-style init U(-1/sqrt(H), 1/sqrt(H)).

    Returns a list of (w_ih_t, w_hh_t) per layer, transposed to (K, 4H), in
    PyTorch gate column order [i, f, g, o] (the checkpoint layout).
    """
    params = []
    bound = 1.0 / (rnn_size ** 0.5)
    in_sz = input_size
    for _ in range(num_layers):
        key, k1, k2 = jax.random.split(key, 3)
        w_ih_t = jax.random.uniform(k1, (in_sz, 4 * rnn_size),
                                    minval=-bound, maxval=bound,
                                    dtype=jnp.float32)
        w_hh_t = jax.random.uniform(k2, (rnn_size, 4 * rnn_size),
                                    minval=-bound, maxval=bound,
                                    dtype=jnp.float32)
        params.append((w_ih_t, w_hh_t))
        in_sz = rnn_size
    return params


def _permute_gate_cols(w, H):
    """PyTorch gate column order [i, f, g, o] -> kernel order [i, f, o, g]."""
    return jnp.concatenate(
        [w[:, 0:2 * H], w[:, 3 * H:4 * H], w[:, 2 * H:3 * H]], axis=1)


def pack_params(params, rnn_size, dtype=jnp.float32):
    """Pack per-layer (w_ih_t, w_hh_t) into stacked, permuted, padded arrays.

    Returns (w_ih_all (L, Kmax, 4H), w_hh_all (L, H, 4H)) with gate columns in
    [i, f, o, g] order and W_ih rows zero-padded up to Kmax = max(in_sizes, H).
    Weights imported from a PyTorch checkpoint must pass through this.
    """
    H = rnn_size
    Kmax = max(max(w_ih.shape[0] for w_ih, _ in params), H)
    w_ih_list, w_hh_list = [], []
    for w_ih, w_hh in params:
        w_ih = _permute_gate_cols(w_ih, H)
        w_hh = _permute_gate_cols(w_hh, H)
        pad = Kmax - w_ih.shape[0]
        if pad:
            w_ih = jnp.pad(w_ih, ((0, pad), (0, 0)))
        w_ih_list.append(w_ih)
        w_hh_list.append(w_hh)
    return (jnp.stack(w_ih_list).astype(dtype),
            jnp.stack(w_hh_list).astype(dtype))


def _reference(x, h0, c0, params):
    """Pure-JAX f32 reference in original PyTorch gate order (unpacked weights)."""
    H = h0.shape[-1]
    inp = x.astype(jnp.float32)
    hs, cs = [], []
    for layer, (w_ih, w_hh) in enumerate(params):
        gates = (jnp.dot(inp, w_ih.astype(jnp.float32))
                 + jnp.dot(h0[layer].astype(jnp.float32), w_hh.astype(jnp.float32)))
        i_g = jax.nn.sigmoid(gates[:, 0 * H:1 * H])
        f_g = jax.nn.sigmoid(gates[:, 1 * H:2 * H])
        g_g = jnp.tanh(gates[:, 2 * H:3 * H])
        o_g = jax.nn.sigmoid(gates[:, 3 * H:4 * H])
        c_new = f_g * c0[layer].astype(jnp.float32) + i_g * g_g
        h_new = o_g * jnp.tanh(c_new)
        inp = h_new  # dropout(eval) == identity
        hs.append(h_new)
        cs.append(c_new)
    return inp, (jnp.stack(hs), jnp.stack(cs))


if __name__ == "__main__":
    num_layers = 3
    batch = 8
    input_size = 128     # lane-dense (multiple of 128)
    rnn_size = 128       # lane-dense (multiple of 128)
    dropout = 0.1        # identity in eval mode

    key = jax.random.PRNGKey(0)
    key, kx, kh, kc, kw = jax.random.split(key, 5)

    x = jax.random.normal(kx, (batch, input_size), dtype=jnp.float32)
    h0 = jax.random.normal(kh, (num_layers, batch, rnn_size), dtype=jnp.float32)
    c0 = jax.random.normal(kc, (num_layers, batch, rnn_size), dtype=jnp.float32)

    params = init_params(kw, num_layers, input_size, rnn_size)
    ref_out, (ref_hs, ref_cs) = _reference(x, h0, c0, params)

    # ---- f32 weights: tight correctness check ----
    w_ih_f32, w_hh_f32 = pack_params(params, rnn_size, dtype=jnp.float32)
    out, (hs, cs) = stacked_lstm_cell_forward(x, h0, c0, w_ih_f32, w_hh_f32)
    out = jax.block_until_ready(out)
    hs = jax.block_until_ready(hs)
    cs = jax.block_until_ready(cs)

    assert out.shape == (batch, rnn_size)
    assert hs.shape == (num_layers, batch, rnn_size)
    assert cs.shape == (num_layers, batch, rnn_size)
    assert jnp.allclose(out, ref_out, atol=1e-5, rtol=1e-5)
    assert jnp.allclose(hs, ref_hs, atol=1e-5, rtol=1e-5)
    assert jnp.allclose(cs, ref_cs, atol=1e-5, rtol=1e-5)

    # ---- bf16 weights (half the weight DMA, 2x MXU rate), f32 accumulation ----
    w_ih_b16, w_hh_b16 = pack_params(params, rnn_size, dtype=jnp.bfloat16)
    out_b, (hs_b, cs_b) = stacked_lstm_cell_forward(x, h0, c0, w_ih_b16, w_hh_b16)
    out_b = jax.block_until_ready(out_b)
    hs_b = jax.block_until_ready(hs_b)
    cs_b = jax.block_until_ready(cs_b)
    assert jnp.allclose(out_b, ref_out, atol=5e-2, rtol=5e-2)
    assert jnp.allclose(hs_b, ref_hs, atol=5e-2, rtol=5e-2)
    assert jnp.allclose(cs_b, ref_cs, atol=5e-2, rtol=5e-2)

    print("KERNEL_OK")
</pallas_src>

<mosaic_0001>
module attributes {stable_mosaic.version = 11 : i64} {
  func.func @_stacked_lstm_kernel(%arg0: i32, %arg1: memref<8x128xf32, #tpu.memory_space<vmem>>, %arg2: memref<1x8x128xf32, #tpu.memory_space<vmem>>, %arg3: memref<1x8x128xf32, #tpu.memory_space<vmem>>, %arg4: memref<1x128x512xf32, #tpu.memory_space<vmem>>, %arg5: memref<1x128x512xf32, #tpu.memory_space<vmem>>, %arg6: memref<1x8x128xf32, #tpu.memory_space<vmem>>, %arg7: memref<1x8x128xf32, #tpu.memory_space<vmem>>, %arg8: memref<8x128xf32, #tpu.memory_space<vmem>>) attributes {dimension_semantics = [#tpu.dimension_semantics<arbitrary>], iteration_bounds = array<i64: 3>, scalar_prefetch = 0 : i64, scratch_operands = 1 : i64, tpu.core_type = #tpu.core_type<tc>, window_params = [{pipeline_mode = #tpu.pipeline_mode<synchronous>, transform_indices = @transform_0, window_bounds = array<i64: 8, 128>}, {transform_indices = @transform_1, window_bounds = array<i64: 1, 8, 128>}, {transform_indices = @transform_2, window_bounds = array<i64: 1, 8, 128>}, {transform_indices = @transform_3, window_bounds = array<i64: 1, 128, 512>}, {transform_indices = @transform_4, window_bounds = array<i64: 1, 128, 512>}, {transform_indices = @transform_5, window_bounds = array<i64: 1, 8, 128>}, {transform_indices = @transform_6, window_bounds = array<i64: 1, 8, 128>}]} {
    %c0_i32 = arith.constant 0 : i32
    %0 = arith.cmpi eq, %arg0, %c0_i32 : i32
    %1 = arith.extui %0 : i1 to i32
    %c0_i32_0 = arith.constant 0 : i32
    %2 = arith.cmpi ne, %1, %c0_i32_0 : i32
    scf.if %2 {
      %c0_24 = arith.constant 0 : index
      %c0_25 = arith.constant 0 : index
      %38 = vector.load %arg1[%c0_24, %c0_25] : memref<8x128xf32, #tpu.memory_space<vmem>>, vector<8x128xf32>
      %c0_26 = arith.constant 0 : index
      %c0_27 = arith.constant 0 : index
      %39 = vector.load %arg8[%c0_26, %c0_27] : memref<8x128xf32, #tpu.memory_space<vmem>>, vector<8x128xf32>
      tpu.vector_store %arg8[%c0_26, %c0_27], %38 {strides = array<i32>} : memref<8x128xf32, #tpu.memory_space<vmem>>, vector<8x128xf32>,
    } else {
    }
    %c0 = arith.constant 0 : index
    %c0_1 = arith.constant 0 : index
    %c0_2 = arith.constant 0 : index
    %3 = vector.load %arg2[%c0, %c0_1, %c0_2] : memref<1x8x128xf32, #tpu.memory_space<vmem>>, vector<1x8x128xf32>
    %4 = vector.shape_cast %3 : vector<1x8x128xf32> to vector<8x128xf32>
    %c0_3 = arith.constant 0 : index
    %c0_4 = arith.constant 0 : index
    %c0_5 = arith.constant 0 : index
    %5 = vector.load %arg3[%c0_3, %c0_4, %c0_5] : memref<1x8x128xf32, #tpu.memory_space<vmem>>, vector<1x8x128xf32>
    %6 = vector.shape_cast %5 : vector<1x8x128xf32> to vector<8x128xf32>
    %c0_6 = arith.constant 0 : index
    %c0_7 = arith.constant 0 : index
    %c0_8 = arith.constant 0 : index
    %7 = vector.load %arg4[%c0_6, %c0_7, %c0_8] : memref<1x128x512xf32, #tpu.memory_space<vmem>>, vector<1x128x512xf32>
    %8 = vector.shape_cast %7 : vector<1x128x512xf32> to vector<128x512xf32>
    %c0_9 = arith.constant 0 : index
    %c0_10 = arith.constant 0 : index
    %c0_11 = arith.constant 0 : index
    %9 = vector.load %arg5[%c0_9, %c0_10, %c0_11] : memref<1x128x512xf32, #tpu.memory_space<vmem>>, vector<1x128x512xf32>
    %10 = vector.shape_cast %9 : vector<1x128x512xf32> to vector<128x512xf32>
    %c0_12 = arith.constant 0 : index
    %c0_13 = arith.constant 0 : index
    %11 = vector.load %arg8[%c0_12, %c0_13] : memref<8x128xf32, #tpu.memory_space<vmem>>, vector<8x128xf32>
    %cst = arith.constant dense<0.000000e+00> : vector<8x512xf32>
    %12 = tpu.matmul %11, %8, %cst {dimension_numbers = #tpu.dot_dimension_numbers<[1], [0], [0], [1], [0, 0, 1, 1], [], []>} : vector<8x128xf32>, vector<128x512xf32>, vector<8x512xf32> -> vector<8x512xf32>
    %cst_14 = arith.constant dense<0.000000e+00> : vector<8x512xf32>
    %13 = tpu.matmul %4, %10, %cst_14 {dimension_numbers = #tpu.dot_dimension_numbers<[1], [0], [0], [1], [0, 0, 1, 1], [], []>} : vector<8x128xf32>, vector<128x512xf32>, vector<8x512xf32> -> vector<8x512xf32>
    %14 = arith.addf %12, %13 : vector<8x512xf32>
    %15 = vector.extract_strided_slice %14 {offsets = [0, 0], sizes = [8, 384], strides = [1, 1]} : vector<8x512xf32> to vector<8x384xf32>
    %16 = arith.negf %15 : vector<8x384xf32>
    %17 = math.exp %16 : vector<8x384xf32>
    %cst_15 = arith.constant 1.000000e+00 : f32
    %18 = vector.broadcast %cst_15 : f32 to vector<8x384xf32>
    %19 = arith.addf %18, %17 : vector<8x384xf32>
    %20 = arith.divf %18, %19 : vector<8x384xf32>
    %21 = vector.extract_strided_slice %20 {offsets = [0, 0], sizes = [8, 128], strides = [1, 1]} : vector<8x384xf32> to vector<8x128xf32>
    %22 = vector.extract_strided_slice %20 {offsets = [0, 128], sizes = [8, 128], strides = [1, 1]} : vector<8x384xf32> to vector<8x128xf32>
    %23 = vector.extract_strided_slice %20 {offsets = [0, 256], sizes = [8, 128], strides = [1, 1]} : vector<8x384xf32> to vector<8x128xf32>
    %24 = vector.extract_strided_slice %14 {offsets = [0, 384], sizes = [8, 128], strides = [1, 1]} : vector<8x512xf32> to vector<8x128xf32>
    %25 = math.tanh %24 : vector<8x128xf32>
    %26 = arith.mulf %22, %6 : vector<8x128xf32>
    %27 = arith.mulf %21, %25 : vector<8x128xf32>
    %28 = arith.addf %26, %27 : vector<8x128xf32>
    %29 = math.tanh %28 : vector<8x128xf32>
    %30 = arith.mulf %23, %29 : vector<8x128xf32>
    %c0_16 = arith.constant 0 : index
    %c0_17 = arith.constant 0 : index
    %c0_18 = arith.constant 0 : index
    %31 = vector.load %arg6[%c0_16, %c0_17, %c0_18] : memref<1x8x128xf32, #tpu.memory_space<vmem>>, vector<1x8x128xf32>
    %32 = vector.shape_cast %31 : vector<1x8x128xf32> to vector<8x128xf32>
    %33 = vector.shape_cast %30 : vector<8x128xf32> to vector<1x8x128xf32>
    tpu.vector_store %arg6[%c0_16, %c0_17, %c0_18], %33 {strides = array<i32>} : memref<1x8x128xf32, #tpu.memory_space<vmem>>, vector<1x8x128xf32>,
    %c0_19 = arith.constant 0 : index
    %c0_20 = arith.constant 0 : index
    %c0_21 = arith.constant 0 : index
    %34 = vector.load %arg7[%c0_19, %c0_20, %c0_21] : memref<1x8x128xf32, #tpu.memory_space<vmem>>, vector<1x8x128xf32>
    %35 = vector.shape_cast %34 : vector<1x8x128xf32> to vector<8x128xf32>
    %36 = vector.shape_cast %28 : vector<8x128xf32> to vector<1x8x128xf32>
    tpu.vector_store %arg7[%c0_19, %c0_20, %c0_21], %36 {strides = array<i32>} : memref<1x8x128xf32, #tpu.memory_space<vmem>>, vector<1x8x128xf32>,
    %c0_22 = arith.constant 0 : index
    %c0_23 = arith.constant 0 : index
    %37 = vector.load %arg8[%c0_22, %c0_23] : memref<8x128xf32, #tpu.memory_space<vmem>>, vector<8x128xf32>
    tpu.vector_store %arg8[%c0_22, %c0_23], %30 {strides = array<i32>} : memref<8x128xf32, #tpu.memory_space<vmem>>, vector<8x128xf32>,
    return
  }
  func.func @transform_0(%arg0: i32) -> (i32, i32) {
    %c0_i32 = arith.constant 0 : i32
    %c0_i32_0 = arith.constant 0 : i32
    %c0_i32_1 = arith.constant 0 : i32
    return %c0_i32, %c0_i32_0 : i32, i32
  }
  func.func @transform_1(%arg0: i32) -> (i32, i32, i32) {
    %c0_i32 = arith.constant 0 : i32
    %c0_i32_0 = arith.constant 0 : i32
    %c0_i32_1 = arith.constant 0 : i32
    return %arg0, %c0_i32, %c0_i32_0 : i32, i32, i32
  }
  func.func @transform_2(%arg0: i32) -> (i32, i32, i32) {
    %c0_i32 = arith.constant 0 : i32
    %c0_i32_0 = arith.constant 0 : i32
    %c0_i32_1 = arith.constant 0 : i32
    return %arg0, %c0_i32, %c0_i32_0 : i32, i32, i32
  }
  func.func @transform_3(%arg0: i32) -> (i32, i32, i32) {
    %c0_i32 = arith.constant 0 : i32
    %c0_i32_0 = arith.constant 0 : i32
    %c0_i32_1 = arith.constant 0 : i32
    return %arg0, %c0_i32, %c0_i32_0 : i32, i32, i32
  }
  func.func @transform_4(%arg0: i32) -> (i32, i32, i32) {
    %c0_i32 = arith.constant 0 : i32
    %c0_i32_0 = arith.constant 0 : i32
    %c0_i32_1 = arith.constant 0 : i32
    return %arg0, %c0_i32, %c0_i32_0 : i32, i32, i32
  }
  func.func @transform_5(%arg0: i32) -> (i32, i32, i32) {
    %c0_i32 = arith.constant 0 : i32
    %c0_i32_0 = arith.constant 0 : i32
    %c0_i32_1 = arith.constant 0 : i32
    return %arg0, %c0_i32, %c0_i32_0 : i32, i32, i32
  }
  func.func @transform_6(%arg0: i32) -> (i32, i32, i32) {
    %c0_i32 = arith.constant 0 : i32
    %c0_i32_0 = arith.constant 0 : i32
    %c0_i32_1 = arith.constant 0 : i32
    return %arg0, %c0_i32, %c0_i32_0 : i32, i32, i32
  }
}

</mosaic_0001>

<llo_original>
// kernel: tpu_custom_call.1
$region0: #{tpu_custom_call.1}
  #allocation0 [shape = 'u32[]', space=smem, size = 0x4, offset = 0x4, fixed_abs, tag = 'smem constant byte address 0x4 - core index']
  #allocation1 [shape = 'u32[144,128]{1,0:T(1,128)}', space=vmem, size = 0x12000, scoped, tag = 'internal scratch']
  #allocation2 [shape = 'f32[8,128]{1,0:T(8,128)}', space=vmem, size = 0x1000, scoped, tag = 'scratch operand']
  %s0 = inlined_call_operand.hbm [shape: f32[8,128], index: 0, kind: input, shape index: {}]
  %s1 = inlined_call_operand.hbm [shape: f32[3,8,128], index: 1, kind: input, shape index: {}]
  %s2 = inlined_call_operand.hbm [shape: f32[3,8,128], index: 2, kind: input, shape index: {}]
  %s3 = inlined_call_operand.hbm [shape: f32[3,128,512], index: 3, kind: input, shape index: {}]
  %s4 = inlined_call_operand.hbm [shape: f32[3,128,512], index: 4, kind: input, shape index: {}]
  %s5 = inlined_call_operand.hbm [shape: f32[3,8,128], index: 5, kind: output, shape index: {0}]
  %s6 = inlined_call_operand.hbm [shape: f32[3,8,128], index: 6, kind: output, shape index: {1}]
  %7 = xla_tuple %s5, %s6
  %s8 = sld [smem:[#allocation0]]
  $region85: #{tpu_custom_call.1} parent=0
    _
  %s10 = ssub.s32 1, %s8
  %s11 = scalar_select 0, %s10, %s8
  $region1: #{tpu_custom_call.1} parent=0
    #allocation3 [shape = 'u8[4096]{0}', space=vmem, size = 0x1000, scoped, tag = 'input window, operand 0, single buffered']
    #allocation4 [shape = 's32[2]{0}', space=sflag, size = 0x8, scoped, tag = 'scoped memory for tpu_custom_call.1']
    #allocation5 [shape = 's32[2]{0}', space=sflag, size = 0x8, scoped, tag = 'scoped memory for tpu_custom_call.1']
    #allocation6 [shape = 'u8[8192]{0}', space=vmem, size = 0x2000, scoped, tag = 'input window, operand 1']
    #allocation7 [shape = 's32[2]{0}', space=sflag, size = 0x8, scoped, tag = 'scoped memory for tpu_custom_call.1']
    #allocation8 [shape = 'u8[8192]{0}', space=vmem, size = 0x2000, scoped, tag = 'input window, operand 2']
    #allocation9 [shape = 'u8[524288]{0}', space=vmem, size = 0x80000, scoped, tag = 'input window, operand 3']
    #allocation10 [shape = 's32[2]{0}', space=sflag, size = 0x8, scoped, tag = 'scoped memory for tpu_custom_call.1']
    #allocation11 [shape = 'u8[524288]{0}', space=vmem, size = 0x80000, scoped, tag = 'input window, operand 4']
    #allocation12 [shape = 'u8[8192]{0}', space=vmem, size = 0x2000, scoped, tag = 'output window, operand 0']
    #allocation13 [shape = 'u8[8192]{0}', space=vmem, size = 0x2000, scoped, tag = 'output window, operand 1']
    #allocation14 [shape = 's32[2]{0}', space=sflag, size = 0x8, scoped, tag = 'scoped memory for tpu_custom_call.1']
    %12 = vsyncpa [#allocation4], 0
    %13 = vsyncpa [#allocation7], 0
    %s14 = scalar_lea.sflag [#allocation7], 1
    %15 = vsyncpa %s14, 0
    %16 = vsyncpa [#allocation10], 0
    %s17 = scalar_lea.sflag [#allocation10], 1
    %18 = vsyncpa %s17, 0
    %19 = vsyncpa [#allocation5], 0
    %s20 = scalar_lea.sflag [#allocation5], 1
    %21 = vsyncpa %s20, 0
    %22 = vsyncpa [#allocation14], 0
    %s23 = scalar_lea.sflag [#allocation14], 1
    %24 = vsyncpa %s23, 0
    loop: start=0, step=1, limit=5
    $region2: #{tpu_custom_call.1} parent=1 // loop_pre_header
      _
    $region3: #{tpu_custom_call.1} parent=1 // loop_header
      %s26 = sphi 0, %s30
      %p27 = scmp.ge.s32.totalorder %s26, 5
      %s34 = sphi 0, %s34
      %s36 = sphi 0, %s34
      %s37 = sphi 0, %s36
      %s51 = sphi 0, %s37
      %s57 = sphi 0, %s59
      %s60 = sphi 0, %s57
      %s61 = sphi 0, %s60
      %s77 = sphi 0, %s61
      %s83 = sphi 0, %s85
      %s86 = sphi 0, %s83
      %s87 = sphi 0, %s86
      %s103 = sphi 0, %s87
      %s109 = sphi 0, %s111
      %s112 = sphi 0, %s109
      %s113 = sphi 0, %s112
      %s129 = sphi 0, %s113
      %s135 = sphi 0, %s137
      %s138 = sphi 0, %s135
      %s139 = sphi 0, %s138
      %s155 = sphi 0, %s139
      %s161 = sphi 0, %s163
      %s164 = sphi 0, %s161
      %s165 = sphi 0, %s164
      %s181 = sphi 0, %s165
      %s187 = sphi 0, %s189
      %s190 = sphi 0, %s187
      %s191 = sphi 0, %s190
      %s207 = sphi 0, %s191
    $region4: #{tpu_custom_call.1} parent=1 // loop_header_branch
      %29 = sbr.rel (%p27) target = $region8
    $region5: #{tpu_custom_call.1} parent=1 // loop_body
      %s31 = ssub.s32 %s26, 1
      %s32 = ssub.s32 %s26, 2
      %s33 = sadd.s32 %s26, 1
      %s35 = sadd.s32 %s34, 1
      %p38 = scmp.eq.s32.totalorder %s26, 2
      %p39 = scmp.ne.s32.totalorder %s34, %s36
      %p40 = scmp.eq.s32.totalorder %s26, 0
      %p41 = por %p39, %p40
      %p42 = scmp.ne.s32.totalorder %s34, %s36
      %p43 = scmp.eq.s32.totalorder %s31, 2
      %p44 = por %p42, %p43
      %p45 = scmp.ne.s32.totalorder %s36, %s37
      %p46 = scmp.eq.s32.totalorder %s31, 0
      %p47 = por %p45, %p46
      %p48 = scmp.ne.s32.totalorder %s36, %s37
      %p49 = scmp.eq.s32.totalorder %s32, 2
      %p50 = por %p48, %p49
      %p52 = scmp.ne.s32.totalorder %s37, %s51
      %p53 = scmp.eq.s32.totalorder %s32, 0
      %p54 = por %p52, %p53
      %s55 = ssub.s32 %s26, %s33
      %p56 = scmp.eq.s32.totalorder %s55, 0
      %s58 = sadd.s32 %s57, 1
      %s59 = scalar_select %p56, %s57, %s58
      %p62 = pneg %p56
      %p63 = scmp.eq.s32.totalorder %s26, 2
      %p64 = por %p62, %p63
      %p65 = scmp.ne.s32.totalorder %s57, %s60
      %p66 = scmp.eq.s32.totalorder %s26, 0
      %p67 = por %p65, %p66
      %p68 = scmp.ne.s32.totalorder %s57, %s60
      %p69 = scmp.eq.s32.totalorder %s31, 2
      %p70 = por %p68, %p69
      %p71 = scmp.ne.s32.totalorder %s60, %s61
      %p72 = scmp.eq.s32.totalorder %s31, 0
      %p73 = por %p71, %p72
      %p74 = scmp.ne.s32.totalorder %s60, %s61
      %p75 = scmp.eq.s32.totalorder %s32, 2
      %p76 = por %p74, %p75
      %p78 = scmp.ne.s32.totalorder %s61, %s77
      %p79 = scmp.eq.s32.totalorder %s32, 0
      %p80 = por %p78, %p79
      %s81 = ssub.s32 %s26, %s33
      %p82 = scmp.eq.s32.totalorder %s81, 0
      %s84 = sadd.s32 %s83, 1
      %s85 = scalar_select %p82, %s83, %s84
      %p88 = pneg %p82
      %p89 = scmp.eq.s32.totalorder %s26, 2
      %p90 = por %p88, %p89
      %p91 = scmp.ne.s32.totalorder %s83, %s86
      %p92 = scmp.eq.s32.totalorder %s26, 0
      %p93 = por %p91, %p92
      %p94 = scmp.ne.s32.totalorder %s83, %s86
      %p95 = scmp.eq.s32.totalorder %s31, 2
      %p96 = por %p94, %p95
      %p97 = scmp.ne.s32.totalorder %s86, %s87
      %p98 = scmp.eq.s32.totalorder %s31, 0
      %p99 = por %p97, %p98
      %p100 = scmp.ne.s32.totalorder %s86, %s87
      %p101 = scmp.eq.s32.totalorder %s32, 2
      %p102 = por %p100, %p101
      %p104 = scmp.ne.s32.totalorder %s87, %s103
      %p105 = scmp.eq.s32.totalorder %s32, 0
      %p106 = por %p104, %p105
      %s107 = ssub.s32 %s26, %s33
      %p108 = scmp.eq.s32.totalorder %s107, 0
      %s110 = sadd.s32 %s109, 1
      %s111 = scalar_select %p108, %s109, %s110
      %p114 = pneg %p108
      %p115 = scmp.eq.s32.totalorder %s26, 2
      %p116 = por %p114, %p115
      %p117 = scmp.ne.s32.totalorder %s109, %s112
      %p118 = scmp.eq.s32.totalorder %s26, 0
      %p119 = por %p117, %p118
      %p120 = scmp.ne.s32.totalorder %s109, %s112
      %p121 = scmp.eq.s32.totalorder %s31, 2
      %p122 = por %p120, %p121
      %p123 = scmp.ne.s32.totalorder %s112, %s113
      %p124 = scmp.eq.s32.totalorder %s31, 0
      %p125 = por %p123, %p124
      %p126 = scmp.ne.s32.totalorder %s112, %s113
      %p127 = scmp.eq.s32.totalorder %s32, 2
      %p128 = por %p126, %p127
      %p130 = scmp.ne.s32.totalorder %s113, %s129
      %p131 = scmp.eq.s32.totalorder %s32, 0
      %p132 = por %p130, %p131
      %s133 = ssub.s32 %s26, %s33
      %p134 = scmp.eq.s32.totalorder %s133, 0
      %s136 = sadd.s32 %s135, 1
      %s137 = scalar_select %p134, %s135, %s136
      %p140 = pneg %p134
      %p141 = scmp.eq.s32.totalorder %s26, 2
      %p142 = por %p140, %p141
      %p143 = scmp.ne.s32.totalorder %s135, %s138
      %p144 = scmp.eq.s32.totalorder %s26, 0
      %p145 = por %p143, %p144
      %p146 = scmp.ne.s32.totalorder %s135, %s138
      %p147 = scmp.eq.s32.totalorder %s31, 2
      %p148 = por %p146, %p147
      %p149 = scmp.ne.s32.totalorder %s138, %s139
      %p150 = scmp.eq.s32.totalorder %s31, 0
      %p151 = por %p149, %p150
      %p152 = scmp.ne.s32.totalorder %s138, %s139
      %p153 = scmp.eq.s32.totalorder %s32, 2
      %p154 = por %p152, %p153
      %p156 = scmp.ne.s32.totalorder %s139, %s155
      %p157 = scmp.eq.s32.totalorder %s32, 0
      %p158 = por %p156, %p157
      %s159 = ssub.s32 %s26, %s33
      %p160 = scmp.eq.s32.totalorder %s159, 0
      %s162 = sadd.s32 %s161, 1
      %s163 = scalar_select %p160, %s161, %s162
      %p166 = pneg %p160
      %p167 = scmp.eq.s32.totalorder %s26, 2
      %p168 = por %p166, %p167
      %p169 = scmp.ne.s32.totalorder %s161, %s164
      %p170 = scmp.eq.s32.totalorder %s26, 0
      %p171 = por %p169, %p170
      %p172 = scmp.ne.s32.totalorder %s161, %s164
      %p173 = scmp.eq.s32.totalorder %s31, 2
      %p174 = por %p172, %p173
      %p175 = scmp.ne.s32.totalorder %s164, %s165
      %p176 = scmp.eq.s32.totalorder %s31, 0
      %p177 = por %p175, %p176
      %p178 = scmp.ne.s32.totalorder %s164, %s165
      %p179 = scmp.eq.s32.totalorder %s32, 2
      %p180 = por %p178, %p179
      %p182 = scmp.ne.s32.totalorder %s165, %s181
      %p183 = scmp.eq.s32.totalorder %s32, 0
      %p184 = por %p182, %p183
      %s185 = ssub.s32 %s26, %s33
      %p186 = scmp.eq.s32.totalorder %s185, 0
      %s188 = sadd.s32 %s187, 1
      %s189 = scalar_select %p186, %s187, %s188
      %p192 = pneg %p186
      %p193 = scmp.eq.s32.totalorder %s26, 2
      %p194 = por %p192, %p193
      %p195 = scmp.ne.s32.totalorder %s187, %s190
      %p196 = scmp.eq.s32.totalorder %s26, 0
      %p197 = por %p195, %p196
      %p198 = scmp.ne.s32.totalorder %s187, %s190
      %p199 = scmp.eq.s32.totalorder %s31, 2
      %p200 = por %p198, %p199
      %p201 = scmp.ne.s32.totalorder %s190, %s191
      %p202 = scmp.eq.s32.totalorder %s31, 0
      %p203 = por %p201, %p202
      %p204 = scmp.ne.s32.totalorder %s190, %s191
      %p205 = scmp.eq.s32.totalorder %s32, 2
      %p206 = por %p204, %p205
      %p208 = scmp.ne.s32.totalorder %s191, %s207
      %p209 = scmp.eq.s32.totalorder %s32, 0
      %p210 = por %p208, %p209
      %p211 = scmp.le.s32.totalorder 1, %s26
      %p212 = scmp.lt.s32.totalorder %s26, 4
      %p213 = pnand %p211, %p212
      %p214 = pneg %p213
      // Predicated region
      $region9: #{tpu_custom_call.1} parent=5 // pred_check
        _
      $region10: #{tpu_custom_call.1} parent=5 // pred_check_branch
        %216 = sbr.rel (%p213) target = $region12
      $region11: #{tpu_custom_call.1} parent=5 // pred_region
        %s217 = ssub.s32 %s26, 1
        // Predicated region
        $region13: #{tpu_custom_call.1} parent=11 // pred_check
          %p218 = pneg %p47
        $region14: #{tpu_custom_call.1} parent=11 // pred_check_branch
          %220 = sbr.rel (%p218) target = $region16
        $region15: #{tpu_custom_call.1} parent=11 // pred_region
          %s222 = ssub.s32 128, 128
          %223 = vsyncadd [#allocation4], %s222
          %s225 = sshll.u32 [#allocation3], 4
          %s226 = int_to_ptr.vmem [resolvable:$true] %s225
          %228 = dma.hbm_to_vmem [thread:$0]  %s0, 128, %s226, [#allocation4]
        $region16: #{tpu_custom_call.1} parent=11 // pred_fallthru
          _
      $region12: #{tpu_custom_call.1} parent=5 // pred_fallthru
        _
      %p229 = scmp.lt.s32.totalorder %s26, 3
      // Predicated region
      $region17: #{tpu_custom_call.1} parent=5 // pred_check
        %p230 = pneg %p229
      $region18: #{tpu_custom_call.1} parent=5 // pred_check_branch
        %232 = sbr.rel (%p230) target = $region20
      $region19: #{tpu_custom_call.1} parent=5 // pred_region
        // Predicated region
        $region21: #{tpu_custom_call.1} parent=19 // pred_check
          %p233 = pneg %p67
        $region22: #{tpu_custom_call.1} parent=19 // pred_check_branch
          %235 = sbr.rel (%p233) target = $region24
        $region23: #{tpu_custom_call.1} parent=19 // pred_region
          %s236 = sand.u32 %s26, 1
          %s237 = scalar_lea.sflag [#allocation7], %s236
          %s238 = sand.u32 %s57, 1
          %s239 = smul.addr %s238, 8
          %s240 = scalar_lea.vmem [#allocation6], %s239
          %s242 = ssub.s32 128, 128
          %243 = vsyncadd %s237, %s242
          %s244 = smul.addr %s26, 128
          %s245 = scalar_lea.hbm %s1, %s244
          %s247 = sshll.u32 %s240, 4
          %s248 = int_to_ptr.vmem [resolvable:$true] %s247
          %250 = dma.hbm_to_vmem [thread:$0]  %s245, 128, %s248, %s237
        $region24: #{tpu_custom_call.1} parent=19 // pred_fallthru
          _
        // Predicated region
        $region25: #{tpu_custom_call.1} parent=19 // pred_check
          %p251 = pneg %p93
        $region26: #{tpu_custom_call.1} parent=19 // pred_check_branch
          %253 = sbr.rel (%p251) target = $region28
        $region27: #{tpu_custom_call.1} parent=19 // pred_region
          %s254 = sand.u32 %s26, 1
          %s255 = scalar_lea.sflag [#allocation7], %s254
          %s256 = sand.u32 %s83, 1
          %s257 = smul.addr %s256, 8
          %s258 = scalar_lea.vmem [#allocation8], %s257
          %s260 = ssub.s32 128, 128
          %261 = vsyncadd %s255, %s260
          %s262 = smul.addr %s26, 128
          %s263 = scalar_lea.hbm %s2, %s262
          %s265 = sshll.u32 %s258, 4
          %s266 = int_to_ptr.vmem [resolvable:$true] %s265
          %268 = dma.hbm_to_vmem [thread:$0]  %s263, 128, %s266, %s255
        $region28: #{tpu_custom_call.1} parent=19 // pred_fallthru
          _
        // Predicated region
        $region29: #{tpu_custom_call.1} parent=19 // pred_check
          %p269 = pneg %p119
        $region30: #{tpu_custom_call.1} parent=19 // pred_check_branch
          %271 = sbr.rel (%p269) target = $region32
        $region31: #{tpu_custom_call.1} parent=19 // pred_region
          %s272 = sand.u32 %s26, 1
          %s273 = scalar_lea.sflag [#allocation10], %s272
          %s274 = sand.u32 %s109, 1
          %s275 = smul.addr %s274, 512
          %s276 = scalar_lea.vmem [#allocation9], %s275
          %s278 = ssub.s32 8192, 8192
          %279 = vsyncadd %s273, %s278
          %s280 = smul.addr %s26, 64
          %s281 = smul.addr %s280, 128
          %s282 = scalar_lea.hbm %s3, %s281
          %s283 = sshll.u32 %s276, 4
          %s284 = int_to_ptr.vmem [resolvable:$true] %s283
          %289 = dma.hbm_to_vmem [thread:$0]  %s282, 8192, %s284, %s273, 512, 512, 32
        $region32: #{tpu_custom_call.1} parent=19 // pred_fallthru
          _
        // Predicated region
        $region33: #{tpu_custom_call.1} parent=19 // pred_check
          %p290 = pneg %p145
        $region34: #{tpu_custom_call.1} parent=19 // pred_check_branch
          %292 = sbr.rel (%p290) target = $region36
        $region35: #{tpu_custom_call.1} parent=19 // pred_region
          %s293 = sand.u32 %s26, 1
          %s294 = scalar_lea.sflag [#allocation10], %s293
          %s295 = sand.u32 %s135, 1
          %s296 = smul.addr %s295, 512
          %s297 = scalar_lea.vmem [#allocation11], %s296
          %s299 = ssub.s32 8192, 8192
          %300 = vsyncadd %s294, %s299
          %s301 = smul.addr %s26, 64
          %s302 = smul.addr %s301, 128
          %s303 = scalar_lea.hbm %s4, %s302
          %s304 = sshll.u32 %s297, 4
          %s305 = int_to_ptr.vmem [resolvable:$true] %s304
          %310 = dma.hbm_to_vmem [thread:$0]  %s303, 8192, %s305, %s294, 512, 512, 32
        $region36: #{tpu_custom_call.1} parent=19 // pred_fallthru
          _
      $region20: #{tpu_custom_call.1} parent=5 // pred_fallthru
        _
      %p311 = scmp.le.s32.totalorder 1, %s26
      %p312 = scmp.lt.s32.totalorder %s26, 4
      %p313 = pnand %p311, %p312
      %p314 = pneg %p313
      // Predicated region
      $region37: #{tpu_custom_call.1} parent=5 // pred_check
        _
      $region38: #{tpu_custom_call.1} parent=5 // pred_check_branch
        %316 = sbr.rel (%p313) target = $region40
      $region39: #{tpu_custom_call.1} parent=5 // pred_region
        %s317 = ssub.s32 %s26, 1
        // Predicated region
        $region41: #{tpu_custom_call.1} parent=39 // pred_check
          %p318 = pneg %p47
        $region42: #{tpu_custom_call.1} parent=39 // pred_check_branch
          %320 = sbr.rel (%p318) target = $region44
        $region43: #{tpu_custom_call.1} parent=39 // pred_region
          %321 = dma.done [#allocation4], 128
        $region44: #{tpu_custom_call.1} parent=39 // pred_fallthru
          _
        %s322 = sand.u32 %s31, 1
        %s323 = scalar_lea.sflag [#allocation7], %s322
        %s324 = sand.u32 %s60, 1
        %s325 = smul.addr %s324, 8
        %s326 = scalar_lea.vmem [#allocation6], %s325
        // Predicated region
        $region45: #{tpu_custom_call.1} parent=39 // pred_check
          %p327 = pneg %p73
        $region46: #{tpu_custom_call.1} parent=39 // pred_check_branch
          %329 = sbr.rel (%p327) target = $region48
        $region47: #{tpu_custom_call.1} parent=39 // pred_region
          %330 = dma.done %s323, 128
        $region48: #{tpu_custom_call.1} parent=39 // pred_fallthru
          _
        %s331 = sand.u32 %s31, 1
        %s332 = scalar_lea.sflag [#allocation7], %s331
        %s333 = sand.u32 %s86, 1
        %s334 = smul.addr %s333, 8
        %s335 = scalar_lea.vmem [#allocation8], %s334
        // Predicated region
        $region49: #{tpu_custom_call.1} parent=39 // pred_check
          %p336 = pneg %p99
        $region50: #{tpu_custom_call.1} parent=39 // pred_check_branch
          %338 = sbr.rel (%p336) target = $region52
        $region51: #{tpu_custom_call.1} parent=39 // pred_region
          %339 = dma.done %s332, 128
        $region52: #{tpu_custom_call.1} parent=39 // pred_fallthru
          _
        %s340 = sand.u32 %s31, 1
        %s341 = scalar_lea.sflag [#allocation10], %s340
        %s342 = sand.u32 %s112, 1
        %s343 = smul.addr %s342, 512
        %s344 = scalar_lea.vmem [#allocation9], %s343
        // Predicated region
        $region53: #{tpu_custom_call.1} parent=39 // pred_check
          %p345 = pneg %p125
        $region54: #{tpu_custom_call.1} parent=39 // pred_check_branch
          %347 = sbr.rel (%p345) target = $region56
        $region55: #{tpu_custom_call.1} parent=39 // pred_region
          %348 = dma.done %s341, 8192
        $region56: #{tpu_custom_call.1} parent=39 // pred_fallthru
          _
        %s349 = sand.u32 %s31, 1
        %s350 = scalar_lea.sflag [#allocation10], %s349
        %s351 = sand.u32 %s138, 1
        %s352 = smul.addr %s351, 512
        %s353 = scalar_lea.vmem [#allocation11], %s352
        // Predicated region
        $region57: #{tpu_custom_call.1} parent=39 // pred_check
          %p354 = pneg %p151
        $region58: #{tpu_custom_call.1} parent=39 // pred_check_branch
          %356 = sbr.rel (%p354) target = $region60
        $region59: #{tpu_custom_call.1} parent=39 // pred_region
          %357 = dma.done %s350, 8192
        $region60: #{tpu_custom_call.1} parent=39 // pred_fallthru
          _
        %p358 = pneg %p47
        %p359 = pneg %p44
        %s360 = sand.u32 %s31, 1
        %s361 = scalar_lea.sflag [#allocation7], %s360
        %s362 = sand.u32 %s60, 1
        %s363 = smul.addr %s362, 8
        %s364 = scalar_lea.vmem [#allocation6], %s363
        %p365 = pneg %p73
        %p366 = pneg %p70
        %s367 = sand.u32 %s31, 1
        %s368 = scalar_lea.sflag [#allocation7], %s367
        %s369 = sand.u32 %s86, 1
        %s370 = smul.addr %s369, 8
        %s371 = scalar_lea.vmem [#allocation8], %s370
        %p372 = pneg %p99
        %p373 = pneg %p96
        %s374 = sand.u32 %s31, 1
        %s375 = scalar_lea.sflag [#allocation10], %s374
        %s376 = sand.u32 %s112, 1
        %s377 = smul.addr %s376, 512
        %s378 = scalar_lea.vmem [#allocation9], %s377
        %p379 = pneg %p125
        %p380 = pneg %p122
        %s381 = sand.u32 %s31, 1
        %s382 = scalar_lea.sflag [#allocation10], %s381
        %s383 = sand.u32 %s138, 1
        %s384 = smul.addr %s383, 512
        %s385 = scalar_lea.vmem [#allocation11], %s384
        %p386 = pneg %p151
        %p387 = pneg %p148
        %p388 = pneg %p177
        %p389 = pneg %p174
        %s390 = sand.u32 %s164, 1
        %s391 = scalar_lea.sflag [#allocation5], %s390
        %s392 = sand.u32 %s164, 1
        %s393 = smul.addr %s392, 8
        %s394 = scalar_lea.vmem [#allocation12], %s393
        %p395 = pneg %p203
        %p396 = pneg %p200
        %s397 = sand.u32 %s190, 1
        %s398 = scalar_lea.sflag [#allocation14], %s397
        %s399 = sand.u32 %s190, 1
        %s400 = smul.addr %s399, 8
        %s401 = scalar_lea.vmem [#allocation13], %s400
        %p402 = scmp.eq.s32.totalorder %s31, 0
        // Predicated region
        $region61: #{tpu_custom_call.1} parent=39 // pred_check
          %p403 = pneg %p402
        $region62: #{tpu_custom_call.1} parent=39 // pred_check_branch
          %405 = sbr.rel (%p403) target = $region64
        $region63: #{tpu_custom_call.1} parent=39 // pred_region
          %v406 = vld [vmem:[#allocation3] sm:$0xff]
          %407 = vst [vmem:[#allocation2] sm:$0xff] %v406
        $region64: #{tpu_custom_call.1} parent=39 // pred_fallthru
          _
        %v408 = vld [vmem:[%s326] sm:$0xff]
        %v409 = vld [vmem:[%s335] sm:$0xff]
        %v410 = vld [vmem:[%s344] sm:$0xff]
        %v411 = vld [vmem:[%s344 + $0x8] sm:$0xff]
        %v412 = vld [vmem:[%s344 + $0x10] sm:$0xff]
        %v413 = vld [vmem:[%s344 + $0x18] sm:$0xff]
        %v414 = vld [vmem:[%s344 + $0x20] sm:$0xff]
        %v415 = vld [vmem:[%s344 + $0x28] sm:$0xff]
        %v416 = vld [vmem:[%s344 + $0x30] sm:$0xff]
        %v417 = vld [vmem:[%s344 + $0x38] sm:$0xff]
        %v418 = vld [vmem:[%s344 + $0x40] sm:$0xff]
        %v419 = vld [vmem:[%s344 + $0x48] sm:$0xff]
        %v420 = vld [vmem:[%s344 + $0x50] sm:$0xff]
        %v421 = vld [vmem:[%s344 + $0x58] sm:$0xff]
        %v422 = vld [vmem:[%s344 + $0x60] sm:$0xff]
        %v423 = vld [vmem:[%s344 + $0x68] sm:$0xff]
        %v424 = vld [vmem:[%s344 + $0x70] sm:$0xff]
        %v425 = vld [vmem:[%s344 + $0x78] sm:$0xff]
        %v426 = vld [vmem:[%s344 + $0x80] sm:$0xff]
        %v427 = vld [vmem:[%s344 + $0x88] sm:$0xff]
        %v428 = vld [vmem:[%s344 + $0x90] sm:$0xff]
        %v429 = vld [vmem:[%s344 + $0x98] sm:$0xff]
        %v430 = vld [vmem:[%s344 + $0xa0] sm:$0xff]
        %v431 = vld [vmem:[%s344 + $0xa8] sm:$0xff]
        %v432 = vld [vmem:[%s344 + $0xb0] sm:$0xff]
        %v433 = vld [vmem:[%s344 + $0xb8] sm:$0xff]
        %v434 = vld [vmem:[%s344 + $0xc0] sm:$0xff]
        %v435 = vld [vmem:[%s344 + $0xc8] sm:$0xff]
        %v436 = vld [vmem:[%s344 + $0xd0] sm:$0xff]
        %v437 = vld [vmem:[%s344 + $0xd8] sm:$0xff]
        %v438 = vld [vmem:[%s344 + $0xe0] sm:$0xff]
        %v439 = vld [vmem:[%s344 + $0xe8] sm:$0xff]
        %v440 = vld [vmem:[%s344 + $0xf0] sm:$0xff]
        %v441 = vld [vmem:[%s344 + $0xf8] sm:$0xff]
        %v442 = vld [vmem:[%s344 + $0x100] sm:$0xff]
        %v443 = vld [vmem:[%s344 + $0x108] sm:$0xff]
        %v444 = vld [vmem:[%s344 + $0x110] sm:$0xff]
        %v445 = vld [vmem:[%s344 + $0x118] sm:$0xff]
        %v446 = vld [vmem:[%s344 + $0x120] sm:$0xff]
        %v447 = vld [vmem:[%s344 + $0x128] sm:$0xff]
        %v448 = vld [vmem:[%s344 + $0x130] sm:$0xff]
        %v449 = vld [vmem:[%s344 + $0x138] sm:$0xff]
        %v450 = vld [vmem:[%s344 + $0x140] sm:$0xff]
        %v451 = vld [vmem:[%s344 + $0x148] sm:$0xff]
        %v452 = vld [vmem:[%s344 + $0x150] sm:$0xff]
        %v453 = vld [vmem:[%s344 + $0x158] sm:$0xff]
        %v454 = vld [vmem:[%s344 + $0x160] sm:$0xff]
        %v455 = vld [vmem:[%s344 + $0x168] sm:$0xff]
        %v456 = vld [vmem:[%s344 + $0x170] sm:$0xff]
        %v457 = vld [vmem:[%s344 + $0x178] sm:$0xff]
        %v458 = vld [vmem:[%s344 + $0x180] sm:$0xff]
        %v459 = vld [vmem:[%s344 + $0x188] sm:$0xff]
        %v460 = vld [vmem:[%s344 + $0x190] sm:$0xff]
        %v461 = vld [vmem:[%s344 + $0x198] sm:$0xff]
        %v462 = vld [vmem:[%s344 + $0x1a0] sm:$0xff]
        %v463 = vld [vmem:[%s344 + $0x1a8] sm:$0xff]
        %v464 = vld [vmem:[%s344 + $0x1b0] sm:$0xff]
        %v465 = vld [vmem:[%s344 + $0x1b8] sm:$0xff]
        %v466 = vld [vmem:[%s344 + $0x1c0] sm:$0xff]
        %v467 = vld [vmem:[%s344 + $0x1c8] sm:$0xff]
        %v468 = vld [vmem:[%s344 + $0x1d0] sm:$0xff]
        %v469 = vld [vmem:[%s344 + $0x1d8] sm:$0xff]
        %v470 = vld [vmem:[%s344 + $0x1e0] sm:$0xff]
        %v471 = vld [vmem:[%s344 + $0x1e8] sm:$0xff]
        %v472 = vld [vmem:[%s344 + $0x1f0] sm:$0xff]
        %v473 = vld [vmem:[%s344 + $0x1f8] sm:$0xff]
        %v474 = vld [vmem:[%s353] sm:$0xff]
        %v475 = vld [vmem:[%s353 + $0x8] sm:$0xff]
        %v476 = vld [vmem:[%s353 + $0x10] sm:$0xff]
        %v477 = vld [vmem:[%s353 + $0x18] sm:$0xff]
        %v478 = vld [vmem:[%s353 + $0x20] sm:$0xff]
        %v479 = vld [vmem:[%s353 + $0x28] sm:$0xff]
        %v480 = vld [vmem:[%s353 + $0x30] sm:$0xff]
        %v481 = vld [vmem:[%s353 + $0x38] sm:$0xff]
        %v482 = vld [vmem:[%s353 + $0x40] sm:$0xff]
        %v483 = vld [vmem:[%s353 + $0x48] sm:$0xff]
        %v484 = vld [vmem:[%s353 + $0x50] sm:$0xff]
        %v485 = vld [vmem:[%s353 + $0x58] sm:$0xff]
        %v486 = vld [vmem:[%s353 + $0x60] sm:$0xff]
        %v487 = vld [vmem:[%s353 + $0x68] sm:$0xff]
        %v488 = vld [vmem:[%s353 + $0x70] sm:$0xff]
        %v489 = vld [vmem:[%s353 + $0x78] sm:$0xff]
        %v490 = vld [vmem:[%s353 + $0x80] sm:$0xff]
        %v491 = vld [vmem:[%s353 + $0x88] sm:$0xff]
        %v492 = vld [vmem:[%s353 + $0x90] sm:$0xff]
        %v493 = vld [vmem:[%s353 + $0x98] sm:$0xff]
        %v494 = vld [vmem:[%s353 + $0xa0] sm:$0xff]
        %v495 = vld [vmem:[%s353 + $0xa8] sm:$0xff]
        %v496 = vld [vmem:[%s353 + $0xb0] sm:$0xff]
        %v497 = vld [vmem:[%s353 + $0xb8] sm:$0xff]
        %v498 = vld [vmem:[%s353 + $0xc0] sm:$0xff]
        %v499 = vld [vmem:[%s353 + $0xc8] sm:$0xff]
        %v500 = vld [vmem:[%s353 + $0xd0] sm:$0xff]
        %v501 = vld [vmem:[%s353 + $0xd8] sm:$0xff]
        %v502 = vld [vmem:[%s353 + $0xe0] sm:$0xff]
        %v503 = vld [vmem:[%s353 + $0xe8] sm:$0xff]
        %v504 = vld [vmem:[%s353 + $0xf0] sm:$0xff]
        %v505 = vld [vmem:[%s353 + $0xf8] sm:$0xff]
        %v506 = vld [vmem:[%s353 + $0x100] sm:$0xff]
        %v507 = vld [vmem:[%s353 + $0x108] sm:$0xff]
        %v508 = vld [vmem:[%s353 + $0x110] sm:$0xff]
        %v509 = vld [vmem:[%s353 + $0x118] sm:$0xff]
        %v510 = vld [vmem:[%s353 + $0x120] sm:$0xff]
        %v511 = vld [vmem:[%s353 + $0x128] sm:$0xff]
        %v512 = vld [vmem:[%s353 + $0x130] sm:$0xff]
        %v513 = vld [vmem:[%s353 + $0x138] sm:$0xff]
        %v514 = vld [vmem:[%s353 + $0x140] sm:$0xff]
        %v515 = vld [vmem:[%s353 + $0x148] sm:$0xff]
        %v516 = vld [vmem:[%s353 + $0x150] sm:$0xff]
        %v517 = vld [vmem:[%s353 + $0x158] sm:$0xff]
        %v518 = vld [vmem:[%s353 + $0x160] sm:$0xff]
        %v519 = vld [vmem:[%s353 + $0x168] sm:$0xff]
        %v520 = vld [vmem:[%s353 + $0x170] sm:$0xff]
        %v521 = vld [vmem:[%s353 + $0x178] sm:$0xff]
        %v522 = vld [vmem:[%s353 + $0x180] sm:$0xff]
        %v523 = vld [vmem:[%s353 + $0x188] sm:$0xff]
        %v524 = vld [vmem:[%s353 + $0x190] sm:$0xff]
        %v525 = vld [vmem:[%s353 + $0x198] sm:$0xff]
        %v526 = vld [vmem:[%s353 + $0x1a0] sm:$0xff]
        %v527 = vld [vmem:[%s353 + $0x1a8] sm:$0xff]
        %v528 = vld [vmem:[%s353 + $0x1b0] sm:$0xff]
        %v529 = vld [vmem:[%s353 + $0x1b8] sm:$0xff]
        %v530 = vld [vmem:[%s353 + $0x1c0] sm:$0xff]
        %v531 = vld [vmem:[%s353 + $0x1c8] sm:$0xff]
        %v532 = vld [vmem:[%s353 + $0x1d0] sm:$0xff]
        %v533 = vld [vmem:[%s353 + $0x1d8] sm:$0xff]
        %v534 = vld [vmem:[%s353 + $0x1e0] sm:$0xff]
        %v535 = vld [vmem:[%s353 + $0x1e8] sm:$0xff]
        %v536 = vld [vmem:[%s353 + $0x1f0] sm:$0xff]
        %v537 = vld [vmem:[%s353 + $0x1f8] sm:$0xff]
        %v538 = vld [vmem:[#allocation2] sm:$0xff]
        %539 = vmatprep.subr.mxu0 %v475
        %540 = vmatpush1.msra.mxu0 %v474
        %541 = vmatprep.subr.mxu0 %v479
        %542 = vmatpush1.msra.mxu0 %v478
        %543 = vmatprep.subr.mxu0 %v483
        %544 = vmatpush1.msra.mxu0 %v482
        %545 = vmatprep.subr.mxu0 %v487
        %546 = vmatpush1.msra.mxu0 %v486
        %547 = vmatprep.subr.mxu0 %v491
        %548 = vmatpush1.msra.mxu0 %v490
        %549 = vmatprep.subr.mxu0 %v495
        %550 = vmatpush1.msra.mxu0 %v494
        %551 = vmatprep.subr.mxu0 %v499
        %552 = vmatpush1.msra.mxu0 %v498
        %553 = vmatprep.subr.mxu0 %v503
        %554 = vmatpush1.msra.mxu0 %v502
        %555 = vmatprep.subr.mxu0 %v507
        %556 = vmatpush1.msra.mxu0 %v506
        %557 = vmatprep.subr.mxu0 %v511
        %558 = vmatpush1.msra.mxu0 %v510
        %559 = vmatprep.subr.mxu0 %v515
        %560 = vmatpush1.msra.mxu0 %v514
        %561 = vmatprep.subr.mxu0 %v519
        %562 = vmatpush1.msra.mxu0 %v518
        %563 = vmatprep.subr.mxu0 %v523
        %564 = vmatpush1.msra.mxu0 %v522
        %565 = vmatprep.subr.mxu0 %v527
        %566 = vmatpush1.msra.mxu0 %v526
        %567 = vmatprep.subr.mxu0 %v531
        %568 = vmatpush1.msra.mxu0 %v530
        %569 = vmatprep.subr.mxu0 %v535
        %570 = vmatpush1.msra.mxu0 %v534
        %571 = vmatprep.subr.mxu0 0.0
        %572 = vmatpush1.msra.mxu0 0.0
        %573 = vmatprep.subr.mxu0 0.0
        %574 = vmatpush1.msra.mxu0 0.0
        %575 = vmatprep.subr.mxu0 0.0
        %576 = vmatpush1.msra.mxu0 0.0
        %577 = vmatprep.subr.mxu0 0.0
        %578 = vmatpush1.msra.mxu0 0.0
        %579 = vmatprep.subr.mxu0 0.0
        %580 = vmatpush1.msra.mxu0 0.0
        %581 = vmatprep.subr.mxu0 0.0
        %582 = vmatpush1.msra.mxu0 0.0
        %583 = vmatprep.subr.mxu0 0.0
        %584 = vmatpush1.msra.mxu0 0.0
        %585 = vmatprep.subr.mxu0 0.0
        %586 = vmatpush1.msra.mxu0 0.0
        %587 = vmatprep.subr.mxu0 0.0
        %588 = vmatpush1.msra.mxu0 0.0
        %589 = vmatprep.subr.mxu0 0.0
        %590 = vmatpush1.msra.mxu0 0.0
        %591 = vmatprep.subr.mxu0 0.0
        %592 = vmatpush1.msra.mxu0 0.0
        %593 = vmatprep.subr.mxu0 0.0
        %594 = vmatpush1.msra.mxu0 0.0
        %595 = vmatprep.subr.mxu0 0.0
        %596 = vmatpush1.msra.mxu0 0.0
        %597 = vmatprep.subr.mxu0 0.0
        %598 = vmatpush1.msra.mxu0 0.0
        %599 = vmatprep.subr.mxu0 0.0
        %600 = vmatpush1.msra.mxu0 0.0
        %601 = vmatprep.subr.mxu0 0.0
        %602 = vmatpush1.msra.mxu0 0.0
        %603 = vmatprep.mubr.f32.mxu0 0.0
        %604 = vmatmul.mubr.f32.gmra.mrb[0].mxu0 %v408
        %v605 = vpop.f32.mrb[0].mxu0
        %v606 = vadd.f32 0.0, %v605
        %v607 = vpop.f32.mrb[0].mxu0
        %v608 = vadd.f32 0.0, %v607
        %609 = vdwg.mxu0
        %610 = vmatprep.subr.mxu0 %v477
        %611 = vmatpush1.msra.mxu0 %v476
        %612 = vmatprep.subr.mxu0 %v481
        %613 = vmatpush1.msra.mxu0 %v480
        %614 = vmatprep.subr.mxu0 %v485
        %615 = vmatpush1.msra.mxu0 %v484
        %616 = vmatprep.subr.mxu0 %v489
        %617 = vmatpush1.msra.mxu0 %v488
        %618 = vmatprep.subr.mxu0 %v493
        %619 = vmatpush1.msra.mxu0 %v492
        %620 = vmatprep.subr.mxu0 %v497
        %621 = vmatpush1.msra.mxu0 %v496
        %622 = vmatprep.subr.mxu0 %v501
        %623 = vmatpush1.msra.mxu0 %v500
        %624 = vmatprep.subr.mxu0 %v505
        %625 = vmatpush1.msra.mxu0 %v504
        %626 = vmatprep.subr.mxu0 %v509
        %627 = vmatpush1.msra.mxu0 %v508
        %628 = vmatprep.subr.mxu0 %v513
        %629 = vmatpush1.msra.mxu0 %v512
        %630 = vmatprep.subr.mxu0 %v517
        %631 = vmatpush1.msra.mxu0 %v516
        %632 = vmatprep.subr.mxu0 %v521
        %633 = vmatpush1.msra.mxu0 %v520
        %634 = vmatprep.subr.mxu0 %v525
        %635 = vmatpush1.msra.mxu0 %v524
        %636 = vmatprep.subr.mxu0 %v529
        %637 = vmatpush1.msra.mxu0 %v528
        %638 = vmatprep.subr.mxu0 %v533
        %639 = vmatpush1.msra.mxu0 %v532
        %640 = vmatprep.subr.mxu0 %v537
        %641 = vmatpush1.msra.mxu0 %v536
        %642 = vmatprep.subr.mxu0 0.0
        %643 = vmatpush1.msra.mxu0 0.0
        %644 = vmatprep.subr.mxu0 0.0
        %645 = vmatpush1.msra.mxu0 0.0
        %646 = vmatprep.subr.mxu0 0.0
        %647 = vmatpush1.msra.mxu0 0.0
        %648 = vmatprep.subr.mxu0 0.0
        %649 = vmatpush1.msra.mxu0 0.0
        %650 = vmatprep.subr.mxu0 0.0
        %651 = vmatpush1.msra.mxu0 0.0
        %652 = vmatprep.subr.mxu0 0.0
        %653 = vmatpush1.msra.mxu0 0.0
        %654 = vmatprep.subr.mxu0 0.0
        %655 = vmatpush1.msra.mxu0 0.0
        %656 = vmatprep.subr.mxu0 0.0
        %657 = vmatpush1.msra.mxu0 0.0
        %658 = vmatprep.subr.mxu0 0.0
        %659 = vmatpush1.msra.mxu0 0.0
        %660 = vmatprep.subr.mxu0 0.0
        %661 = vmatpush1.msra.mxu0 0.0
        %662 = vmatprep.subr.mxu0 0.0
        %663 = vmatpush1.msra.mxu0 0.0
        %664 = vmatprep.subr.mxu0 0.0
        %665 = vmatpush1.msra.mxu0 0.0
        %666 = vmatprep.subr.mxu0 0.0
        %667 = vmatpush1.msra.mxu0 0.0
        %668 = vmatprep.subr.mxu0 0.0
        %669 = vmatpush1.msra.mxu0 0.0
        %670 = vmatprep.subr.mxu0 0.0
        %671 = vmatpush1.msra.mxu0 0.0
        %672 = vmatprep.subr.mxu0 0.0
        %673 = vmatpush1.msra.mxu0 0.0
        %674 = vmatprep.mubr.f32.mxu0 0.0
        %675 = vmatmul.mubr.f32.gmra.mrb[0].mxu0 %v408
        %v676 = vpop.f32.mrb[0].mxu0
        %v677 = vadd.f32 0.0, %v676
        %v678 = vpop.f32.mrb[0].mxu0
        %v679 = vadd.f32 0.0, %v678
        %680 = vdwg.mxu0
        %681 = vmatprep.subr.mxu0 %v411
        %682 = vmatpush1.msra.mxu0 %v410
        %683 = vmatprep.subr.mxu0 %v415
        %684 = vmatpush1.msra.mxu0 %v414
        %685 = vmatprep.subr.mxu0 %v419
        %686 = vmatpush1.msra.mxu0 %v418
        %687 = vmatprep.subr.mxu0 %v423
        %688 = vmatpush1.msra.mxu0 %v422
        %689 = vmatprep.subr.mxu0 %v427
        %690 = vmatpush1.msra.mxu0 %v426
        %691 = vmatprep.subr.mxu0 %v431
        %692 = vmatpush1.msra.mxu0 %v430
        %693 = vmatprep.subr.mxu0 %v435
        %694 = vmatpush1.msra.mxu0 %v434
        %695 = vmatprep.subr.mxu0 %v439
        %696 = vmatpush1.msra.mxu0 %v438
        %697 = vmatprep.subr.mxu0 %v443
        %698 = vmatpush1.msra.mxu0 %v442
        %699 = vmatprep.subr.mxu0 %v447
        %700 = vmatpush1.msra.mxu0 %v446
        %701 = vmatprep.subr.mxu0 %v451
        %702 = vmatpush1.msra.mxu0 %v450
        %703 = vmatprep.subr.mxu0 %v455
        %704 = vmatpush1.msra.mxu0 %v454
        %705 = vmatprep.subr.mxu0 %v459
        %706 = vmatpush1.msra.mxu0 %v458
        %707 = vmatprep.subr.mxu0 %v463
        %708 = vmatpush1.msra.mxu0 %v462
        %709 = vmatprep.subr.mxu0 %v467
        %710 = vmatpush1.msra.mxu0 %v466
        %711 = vmatprep.subr.mxu0 %v471
        %712 = vmatpush1.msra.mxu0 %v470
        %713 = vmatprep.subr.mxu0 0.0
        %714 = vmatpush1.msra.mxu0 0.0
        %715 = vmatprep.subr.mxu0 0.0
        %716 = vmatpush1.msra.mxu0 0.0
        %717 = vmatprep.subr.mxu0 0.0
        %718 = vmatpush1.msra.mxu0 0.0
        %719 = vmatprep.subr.mxu0 0.0
        %720 = vmatpush1.msra.mxu0 0.0
        %721 = vmatprep.subr.mxu0 0.0
        %722 = vmatpush1.msra.mxu0 0.0
        %723 = vmatprep.subr.mxu0 0.0
        %724 = vmatpush1.msra.mxu0 0.0
        %725 = vmatprep.subr.mxu0 0.0
        %726 = vmatpush1.msra.mxu0 0.0
        %727 = vmatprep.subr.mxu0 0.0
        %728 = vmatpush1.msra.mxu0 0.0
        %729 = vmatprep.subr.mxu0 0.0
        %730 = vmatpush1.msra.mxu0 0.0
        %731 = vmatprep.subr.mxu0 0.0
        %732 = vmatpush1.msra.mxu0 0.0
        %733 = vmatprep.subr.mxu0 0.0
        %734 = vmatpush1.msra.mxu0 0.0
        %735 = vmatprep.subr.mxu0 0.0
        %736 = vmatpush1.msra.mxu0 0.0
        %737 = vmatprep.subr.mxu0 0.0
        %738 = vmatpush1.msra.mxu0 0.0
        %739 = vmatprep.subr.mxu0 0.0
        %740 = vmatpush1.msra.mxu0 0.0
        %741 = vmatprep.subr.mxu0 0.0
        %742 = vmatpush1.msra.mxu0 0.0
        %743 = vmatprep.subr.mxu0 0.0
        %744 = vmatpush1.msra.mxu0 0.0
        %745 = vmatprep.mubr.f32.mxu0 0.0
        %746 = vmatmul.mubr.f32.gmra.mrb[0].mxu0 %v538
        %v747 = vpop.f32.mrb[0].mxu0
        %v748 = vadd.f32 %v606, %v747
        %v749 = vpop.f32.mrb[0].mxu0
        %v750 = vadd.f32 %v608, %v749
        %751 = vdwg.mxu0
        %752 = vmatprep.subr.mxu0 %v413
        %753 = vmatpush1.msra.mxu0 %v412
        %754 = vmatprep.subr.mxu0 %v417
        %755 = vmatpush1.msra.mxu0 %v416
        %756 = vmatprep.subr.mxu0 %v421
        %757 = vmatpush1.msra.mxu0 %v420
        %758 = vmatprep.subr.mxu0 %v425
        %759 = vmatpush1.msra.mxu0 %v424
        %760 = vmatprep.subr.mxu0 %v429
        %761 = vmatpush1.msra.mxu0 %v428
        %762 = vmatprep.subr.mxu0 %v433
        %763 = vmatpush1.msra.mxu0 %v432
        %764 = vmatprep.subr.mxu0 %v437
        %765 = vmatpush1.msra.mxu0 %v436
        %766 = vmatprep.subr.mxu0 %v441
        %767 = vmatpush1.msra.mxu0 %v440
        %768 = vmatprep.subr.mxu0 %v445
        %769 = vmatpush1.msra.mxu0 %v444
        %770 = vmatprep.subr.mxu0 %v449
        %771 = vmatpush1.msra.mxu0 %v448
        %772 = vmatprep.subr.mxu0 %v453
        %773 = vmatpush1.msra.mxu0 %v452
        %774 = vmatprep.subr.mxu0 %v457
        %775 = vmatpush1.msra.mxu0 %v456
        %776 = vmatprep.subr.mxu0 %v461
        %777 = vmatpush1.msra.mxu0 %v460
        %778 = vmatprep.subr.mxu0 %v465
        %779 = vmatpush1.msra.mxu0 %v464
        %780 = vmatprep.subr.mxu0 %v469
        %781 = vmatpush1.msra.mxu0 %v468
        %782 = vmatprep.subr.mxu0 %v473
        %783 = vmatpush1.msra.mxu0 %v472
        %784 = vmatprep.subr.mxu0 0.0
        %785 = vmatpush1.msra.mxu0 0.0
        %786 = vmatprep.subr.mxu0 0.0
        %787 = vmatpush1.msra.mxu0 0.0
        %788 = vmatprep.subr.mxu0 0.0
        %789 = vmatpush1.msra.mxu0 0.0
        %790 = vmatprep.subr.mxu0 0.0
        %791 = vmatpush1.msra.mxu0 0.0
        %792 = vmatprep.subr.mxu0 0.0
        %793 = vmatpush1.msra.mxu0 0.0
        %794 = vmatprep.subr.mxu0 0.0
        %795 = vmatpush1.msra.mxu0 0.0
        %796 = vmatprep.subr.mxu0 0.0
        %797 = vmatpush1.msra.mxu0 0.0
        %798 = vmatprep.subr.mxu0 0.0
        %799 = vmatpush1.msra.mxu0 0.0
        %800 = vmatprep.subr.mxu0 0.0
        %801 = vmatpush1.msra.mxu0 0.0
        %802 = vmatprep.subr.mxu0 0.0
        %803 = vmatpush1.msra.mxu0 0.0
        %804 = vmatprep.subr.mxu0 0.0
        %805 = vmatpush1.msra.mxu0 0.0
        %806 = vmatprep.subr.mxu0 0.0
        %807 = vmatpush1.msra.mxu0 0.0
        %808 = vmatprep.subr.mxu0 0.0
        %809 = vmatpush1.msra.mxu0 0.0
        %810 = vmatprep.subr.mxu0 0.0
        %811 = vmatpush1.msra.mxu0 0.0
        %812 = vmatprep.subr.mxu0 0.0
        %813 = vmatpush1.msra.mxu0 0.0
        %814 = vmatprep.subr.mxu0 0.0
        %815 = vmatpush1.msra.mxu0 0.0
        %816 = vmatprep.mubr.f32.mxu0 0.0
        %817 = vmatmul.mubr.f32.gmra.mrb[0].mxu0 %v538
        %v818 = vpop.f32.mrb[0].mxu0
        %v819 = vadd.f32 %v677, %v818
        %v820 = vpop.f32.mrb[0].mxu0
        %v821 = vadd.f32 %v679, %v820
        %822 = vdwg.mxu0
        %v823 = vxor.u32 %v748, 2147483648
        %v824 = vxor.u32 %v750, 2147483648
        %v825 = vxor.u32 %v819, 2147483648
        %v826 = vmul.f32 %v823, 1.442695
        %v827 = vpow.pop %v826
        %v828 = vmul.f32 %v824, 1.442695
        %v829 = vpow.pop %v828
        %v830 = vmul.f32 %v825, 1.442695
        %v831 = vpow.pop %v830
        %v832 = vadd.f32 %v827, 1.0
        %v833 = vadd.f32 %v829, 1.0
        %v834 = vadd.f32 %v831, 1.0
        %v835 = vrcp.pop %v832
        %v836 = vmul.f32 1.0, %v835
        %v837 = vrcp.pop %v833
        %v838 = vmul.f32 1.0, %v837
        %v839 = vrcp.pop %v834
        %v840 = vmul.f32 1.0, %v839
        %v841 = vtanh.pop %v821
        %v842 = vmul.f32 %v838, %v409
        %v843 = vmul.f32 %v836, %v841
        %v844 = vadd.f32 %v842, %v843
        %v845 = vtanh.pop %v844
        %v846 = vmul.f32 %v840, %v845
        %847 = vst [vmem:[%s394] sm:$0xff] %v846
        %848 = vst [vmem:[%s401] sm:$0xff] %v844
        %849 = vst [vmem:[#allocation2] sm:$0xff] %v846
        %s850 = sand.u32 %s164, 1
        %s851 = scalar_lea.sflag [#allocation5], %s850
        %s852 = sand.u32 %s164, 1
        %s853 = smul.addr %s852, 8
        %s854 = scalar_lea.vmem [#allocation12], %s853
        %s855 = sand.u32 %s190, 1
        %s856 = scalar_lea.sflag [#allocation14], %s855
        %s857 = sand.u32 %s190, 1
        %s858 = smul.addr %s857, 8
        %s859 = scalar_lea.vmem [#allocation13], %s858
        // Predicated region
        $region65: #{tpu_custom_call.1} parent=39 // pred_check
          %p860 = pneg %p174
        $region66: #{tpu_custom_call.1} parent=39 // pred_check_branch
          %862 = sbr.rel (%p860) target = $region68
        $region67: #{tpu_custom_call.1} parent=39 // pred_region
          %s864 = ssub.s32 128, 128
          %865 = vsyncadd %s851, %s864
          %s866 = smul.addr %s31, 128
          %s867 = scalar_lea.hbm %s5, %s866
          %s869 = sshll.u32 %s854, 4
          %s870 = int_to_ptr.vmem [resolvable:$true] %s869
          %872 = dma.vmem_to_hbm [thread:$0]  %s870, 128, %s867, %s851
        $region68: #{tpu_custom_call.1} parent=39 // pred_fallthru
          _
        // Predicated region
        $region69: #{tpu_custom_call.1} parent=39 // pred_check
          %p873 = pneg %p200
        $region70: #{tpu_custom_call.1} parent=39 // pred_check_branch
          %875 = sbr.rel (%p873) target = $region72
        $region71: #{tpu_custom_call.1} parent=39 // pred_region
          %s877 = ssub.s32 128, 128
          %878 = vsyncadd %s856, %s877
          %s879 = smul.addr %s31, 128
          %s880 = scalar_lea.hbm %s6, %s879
          %s882 = sshll.u32 %s859, 4
          %s883 = int_to_ptr.vmem [resolvable:$true] %s882
          %885 = dma.vmem_to_hbm [thread:$0]  %s883, 128, %s880, %s856
        $region72: #{tpu_custom_call.1} parent=39 // pred_fallthru
          _
      $region40: #{tpu_custom_call.1} parent=5 // pred_fallthru
        _
      %p886 = scmp.le.s32.totalorder 2, %s26
      // Predicated region
      $region73: #{tpu_custom_call.1} parent=5 // pred_check
        %p887 = pneg %p886
      $region74: #{tpu_custom_call.1} parent=5 // pred_check_branch
        %889 = sbr.rel (%p887) target = $region76
      $region75: #{tpu_custom_call.1} parent=5 // pred_region
        %s890 = ssub.s32 %s26, 2
        // Predicated region
        $region77: #{tpu_custom_call.1} parent=75 // pred_check
          %p891 = pneg %p180
        $region78: #{tpu_custom_call.1} parent=75 // pred_check_branch
          %893 = sbr.rel (%p891) target = $region80
        $region79: #{tpu_custom_call.1} parent=75 // pred_region
          %s894 = sand.u32 %s165, 1
          %s895 = scalar_lea.sflag [#allocation5], %s894
          %s896 = sand.u32 %s165, 1
          %s897 = smul.addr %s896, 8
          %s898 = scalar_lea.vmem [#allocation12], %s897
          %899 = dma.done %s895, 128
        $region80: #{tpu_custom_call.1} parent=75 // pred_fallthru
          _
        // Predicated region
        $region81: #{tpu_custom_call.1} parent=75 // pred_check
          %p900 = pneg %p206
        $region82: #{tpu_custom_call.1} parent=75 // pred_check_branch
          %902 = sbr.rel (%p900) target = $region84
        $region83: #{tpu_custom_call.1} parent=75 // pred_region
          %s903 = sand.u32 %s191, 1
          %s904 = scalar_lea.sflag [#allocation14], %s903
          %s905 = sand.u32 %s191, 1
          %s906 = smul.addr %s905, 8
          %s907 = scalar_lea.vmem [#allocation13], %s906
          %908 = dma.done %s904, 128
        $region84: #{tpu_custom_call.1} parent=75 // pred_fallthru
          _
      $region76: #{tpu_custom_call.1} parent=5 // pred_fallthru
        _
    $region6: #{tpu_custom_call.1} parent=1 // loop_footer
      %s30 = sadd.s32 1, %s26
    $region7: #{tpu_custom_call.1} parent=1 // loop_footer_branch
      %25 = sbr.rel target = $region3
    $region8: #{tpu_custom_call.1} parent=1 // loop_exit
      _
    %909 = vsyncpa [#allocation4], 1
    %s910 = scalar_lea.sflag [#allocation4], 1
    %911 = vsyncpa %s910, 1
    %912 = vsyncpa [#allocation7], 1
    %s913 = scalar_lea.sflag [#allocation7], 1
    %914 = vsyncpa %s913, 1
    %915 = vsyncpa [#allocation10], 1
    %s916 = scalar_lea.sflag [#allocation10], 1
    %917 = vsyncpa %s916, 1
    %918 = vsyncpa [#allocation5], 1
    %s919 = scalar_lea.sflag [#allocation5], 1
    %920 = vsyncpa %s919, 1
    %921 = vsyncpa [#allocation14], 1
    %s922 = scalar_lea.sflag [#allocation14], 1
    %923 = vsyncpa %s922, 1

</llo_original>
